<compile_context>
chip_gen: v5e
topology: v5e:2x2
jax: 0.10.0
libtpu: 0.0.40
codegen_flags: <defaults>
</compile_context>

<pallas_src>
import functools

import jax
import jax.numpy as jnp
import numpy as np
from jax.experimental import pallas as pl
from jax.experimental.pallas import tpu as pltpu

_VAL_LANES = 128  # pad the 1-wide value-head output to a lane-dense 128-wide slab


def _policy_value_kernel(x_ref, w1_ref, w2_ref, wlm_ref, wsc_ref,
                         hid_ref, lm_ref, val_ref, acc_ref, h_bf_ref, *, nk):
    """One (row-tile i, phase-step j) grid step.

    The j axis is phase-merged: steps 0..nk-1 are trunk F-chunks, steps nk.. are
    lm_head vocab tiles.

    x:    (tm, H)   bf16 input hidden-state row tile      (constant over j)
    w1:   (H, fk)   bf16 MLP up-projection chunk          (chunk j during trunk phase)
    w2:   (fk, H)   bf16 MLP down-projection chunk        (chunk j during trunk phase)
    wlm:  (H, tn)   bf16 lm_head vocab tile               (tile j-nk during lm phase)
    wsc:  (1, H)    bf16 score weight (nn.Linear(H, 1, bias=False))
    hid:  (tm, H)   out: last hidden state     (written at j == nk-1, resident over j)
    lm:   (tm, tn)  out: policy logits tile    (written during lm phase)
    val:  (tm, 128) out: value logits, padded  (written at j == nk-1, resident over j)
    acc:  (tm, H)   f32 VMEM scratch: trunk accumulator over F-chunks
    h_bf: (tm, H)   bf16 VMEM scratch: cached trunk output reused by every vocab tile
    """
    j = pl.program_id(1)

    @pl.when(j < nk)
    def _trunk_step():
        @pl.when(j == 0)
        def _init():
            acc_ref[...] = jnp.zeros_like(acc_ref)

        # gelu(x @ W1_chunk) -> bf16 immediately (only a (tm, fk) temp), then
        # accumulate the partial down-projection in f32. bf16 MXU operands,
        # f32 accumulation throughout.
        h1 = jax.nn.gelu(
            jnp.dot(x_ref[...], w1_ref[...], preferred_element_type=jnp.float32))
        acc_ref[...] += jnp.dot(h1.astype(jnp.bfloat16), w2_ref[...],
                                preferred_element_type=jnp.float32)

        @pl.when(j == nk - 1)
        def _finalize_trunk():
            h = acc_ref[...]
            h_bf = h.astype(jnp.bfloat16)
            h_bf_ref[...] = h_bf
            # hidden_states is written from the same bf16 value that feeds the
            # lm_head (single live copy of h; bf16 HBM writeback).
            hid_ref[...] = h_bf.astype(hid_ref.dtype)

            # Value head Linear(H, 1, bias=False): keep it OFF the MXU (N=1 would
            # waste 127/255 output columns). VPU multiply + XLU lane reduce from the
            # full-f32 trunk, broadcast across 128 padded lanes -> unmasked vst.
            # NOTE: value is computed from the f32 trunk, so it is not bit-identical
            # to score(bf16 hidden_states) — matches the pure-JAX reference.
            val = jnp.sum(h * wsc_ref[...].astype(jnp.float32),
                          axis=-1, keepdims=True)
            val_ref[...] = jnp.broadcast_to(val, val_ref.shape).astype(val_ref.dtype)

    @pl.when(j >= nk)
    def _lm_head_step():
        # lm_head vocab tile: (tm, H) @ (H, tn) on the MXU, reusing the cached trunk.
        lm_ref[...] = jnp.dot(h_bf_ref[...], wlm_ref[...],
                              preferred_element_type=jnp.float32).astype(lm_ref.dtype)


def _round_up(n, m):
    return ((n + m - 1) // m) * m


def _pick_f_chunk(F, fk):
    """Largest chunk <= fk that is a multiple of 128 and divides F exactly (else F).

    Exact divisibility keeps padded-garbage columns out of the trunk reduction.
    """
    fk = min(fk, F)
    if fk >= F:
        return F
    fk = (fk // 128) * 128
    while fk >= 128:
        if F % fk == 0:
            return fk
        fk -= 128
    return F


def _vmem_limit_bytes():
    """Per-generation scoped-VMEM budget (64 MiB/TC on v7x, 128 MiB on v5e/v6e)."""
    try:
        cap = pltpu.get_tpu_info().vmem_capacity_bytes
        return min(int(cap * 0.85), 100 * 1024 * 1024)
    except Exception:
        return 48 * 1024 * 1024  # conservative fallback, works on every generation


@functools.partial(jax.jit, static_argnames=("tm", "tn", "fk", "out_dtype"))
def policy_and_value_forward(x, w1, w2, w_lm, w_score, *,
                             tm=512, tn=512, fk=512, out_dtype=jnp.bfloat16):
    """Fused PolicyAndValueWrapper forward.

    Args:
      x:        [B, S, H] input hidden states (stand-in for the policy trunk input).
      w1:       [H, F]  policy MLP up weight.
      w2:       [F, H]  policy MLP down weight.
      w_lm:     [H, V]  policy lm_head weight.
      w_score:  [H, 1] (or [1, H]) value score weight (Linear(H, 1, bias=False)).
      tm:       row tile along M = B*S (512 keeps the lm_head MXU-bound on all gens).
      tn:       vocab tile along V (multiple of 128).
      fk:       F-chunk size for the streamed trunk reduction (multiple of 128).
      out_dtype: dtype of hidden_states / logits outputs (bf16 halves HBM writeback).

    Returns:
      (policy_output, value_logits) with
        policy_output = {"hidden_states": [B, S, H], "logits": [B, S, V]}
        value_logits  = [B, S, 1]  (f32)
    """
    B, S, H = x.shape
    F = w1.shape[1]
    V = w_lm.shape[1]
    M = B * S

    # Clamp tiles so tiny demo shapes don't over-pad; real shapes keep the defaults.
    tm = min(tm, _round_up(M, 8))
    tn = min(tn, _round_up(V, 128))
    fk = _pick_f_chunk(F, fk)
    nk = F // fk          # trunk chunk steps (exact by construction)
    nv = pl.cdiv(V, tn)   # lm_head vocab-tile steps

    # bf16 operands for the MXU; accumulation stays f32 inside the kernel.
    x2d = x.reshape(M, H).astype(jnp.bfloat16)
    w1b = w1.astype(jnp.bfloat16)
    w2b = w2.astype(jnp.bfloat16)
    wlmb = w_lm.astype(jnp.bfloat16)
    wscb = w_score.reshape(1, H).astype(jnp.bfloat16)

    # Phase-merged second grid axis: nk trunk-chunk steps, then nv vocab-tile steps.
    grid = (pl.cdiv(M, tm), nk + nv)

    # During the lm phase the W1/W2 index stays pinned at the last chunk (no refetch);
    # during the trunk phase the W_lm index stays pinned at vocab tile 0 (free
    # prefetch behind the trunk matmuls).
    w1_map = lambda i, j: (0, jnp.minimum(j, nk - 1))
    w2_map = lambda i, j: (jnp.minimum(j, nk - 1), 0)
    wlm_map = lambda i, j: (0, jnp.maximum(j - nk, 0))
    lm_out_map = lambda i, j: (i, jnp.maximum(j - nk, 0))

    # TODO(synk): on v7x prefer an even number of row tiles (M/tm) so both
    # TensorCores get equal work under the "parallel" i axis; and for very large
    # M/tm on v6e a separate 3-axis lm_head matmul kernel (bf16 h via HBM) allows
    # tm >= 1024 and fewer W_lm re-streams.
    hidden, lm_logits, val_pad = pl.pallas_call(
        functools.partial(_policy_value_kernel, nk=nk),
        out_shape=(
            jax.ShapeDtypeStruct((M, H), out_dtype),
            jax.ShapeDtypeStruct((M, V), out_dtype),
            jax.ShapeDtypeStruct((M, _VAL_LANES), jnp.float32),
        ),
        grid=grid,
        in_specs=[
            pl.BlockSpec((tm, H), lambda i, j: (i, 0)),   # x row tile (constant in j)
            pl.BlockSpec((H, fk), w1_map),                # W1 chunk (streamed)
            pl.BlockSpec((fk, H), w2_map),                # W2 chunk (streamed)
            pl.BlockSpec((H, tn), wlm_map),               # lm_head vocab tile
            pl.BlockSpec((1, H), lambda i, j: (0, 0)),    # score head (tiny, invariant)
        ],
        out_specs=(
            pl.BlockSpec((tm, H), lambda i, j: (i, 0)),           # hidden (resident)
            pl.BlockSpec((tm, tn), lm_out_map),                   # logits tile
            pl.BlockSpec((tm, _VAL_LANES), lambda i, j: (i, 0)),  # value (resident)
        ),
        scratch_shapes=[
            pltpu.VMEM((tm, H), jnp.float32),    # f32 trunk accumulator over F-chunks
            pltpu.VMEM((tm, H), jnp.bfloat16),   # bf16 trunk cache for lm_head reuse
        ],
        compiler_params=pltpu.CompilerParams(
            # Row tiles shard across the 2 TensorCores on v7x; the phase-merged j
            # axis is the sequential/resident axis (scratch + hidden/value outputs).
            dimension_semantics=("parallel", "arbitrary"),
            vmem_limit_bytes=_vmem_limit_bytes(),
        ),
    )(x2d, w1b, w2b, wlmb, wscb)

    policy_output = {
        "hidden_states": hidden.reshape(B, S, H),
        "logits": lm_logits.reshape(B, S, V),
    }
    value_logits = val_pad[:, :1].reshape(B, S, 1)
    return policy_output, value_logits


def _reference_forward(x, w1, w2, w_lm, w_score):
    """Pure-JAX reference mirroring the kernel's bf16-operand / f32-accumulate math."""
    f32 = jnp.float32
    bf = lambda a: a.astype(jnp.bfloat16).astype(f32)
    _, _, H = x.shape
    xb = bf(x.reshape(-1, H))
    h1 = jax.nn.gelu(xb @ bf(w1))
    h = bf(h1) @ bf(w2)
    lm = bf(h) @ bf(w_lm)
    val = h @ bf(w_score.reshape(H, 1))
    return h, lm, val


if __name__ == "__main__":
    # Small shapes consistent with the module: batch=2, seq=8, hidden=32.
    B, S, H, F, V = 2, 8, 32, 64, 128

    key = jax.random.PRNGKey(0)
    k_x, k_w1, k_w2, k_lm, k_sc = jax.random.split(key, 5)

    x = jax.random.normal(k_x, (B, S, H), dtype=jnp.float32)
    w1 = jax.random.normal(k_w1, (H, F), dtype=jnp.float32) * 0.05
    w2 = jax.random.normal(k_w2, (F, H), dtype=jnp.float32) * 0.05
    w_lm = jax.random.normal(k_lm, (H, V), dtype=jnp.float32) * 0.05
    # nn.Linear(hidden_size, 1, bias=False): weight (1, H) in torch; stored here as
    # (H, 1) — the wrapper reshapes to (1, H) for the in-kernel VPU reduction.
    w_score = jax.random.normal(k_sc, (H, 1), dtype=jnp.float32) * 0.05

    policy_out, value_logits = policy_and_value_forward(x, w1, w2, w_lm, w_score)
    jax.block_until_ready((policy_out, value_logits))

    # Correctness check against pure-JAX reference (hidden/logits are emitted in
    # bf16 by the kernel, so round the reference identically before comparing).
    h_exp, lm_exp, val_exp = _reference_forward(x, w1, w2, w_lm, w_score)
    h_exp_bf = np.asarray(h_exp.astype(jnp.bfloat16).astype(jnp.float32))
    lm_exp_bf = np.asarray(lm_exp.astype(jnp.bfloat16).astype(jnp.float32))

    np.testing.assert_allclose(
        np.asarray(policy_out["hidden_states"].astype(jnp.float32)).reshape(-1, H),
        h_exp_bf, rtol=2e-2, atol=2e-3)
    np.testing.assert_allclose(
        np.asarray(policy_out["logits"].astype(jnp.float32)).reshape(-1, V),
        lm_exp_bf, rtol=2e-2, atol=2e-3)
    np.testing.assert_allclose(
        np.asarray(value_logits).reshape(-1, 1),
        np.asarray(val_exp), rtol=2e-2, atol=2e-3)

    # TODO(synk): the real `policy` / `value_model` are full pretrained transformers;
    # here they are replaced by a synthetic MLP trunk + lm_head with identical wrapper
    # semantics (hidden_states[-1] -> Linear(H, 1, bias=False) value score).
    print("KERNEL_OK")
</pallas_src>

<mosaic_0001>
module attributes {stable_mosaic.version = 11 : i64} {
  func.func @_policy_value_kernel(%arg0: i32, %arg1: i32, %arg2: memref<16x32xbf16, #tpu.memory_space<vmem>>, %arg3: memref<32x64xbf16, #tpu.memory_space<vmem>>, %arg4: memref<64x32xbf16, #tpu.memory_space<vmem>>, %arg5: memref<32x128xbf16, #tpu.memory_space<vmem>>, %arg6: memref<1x32xbf16, #tpu.memory_space<vmem>>, %arg7: memref<16x32xbf16, #tpu.memory_space<vmem>>, %arg8: memref<16x128xbf16, #tpu.memory_space<vmem>>, %arg9: memref<16x128xf32, #tpu.memory_space<vmem>>, %arg10: memref<16x32xf32, #tpu.memory_space<vmem>>, %arg11: memref<16x32xbf16, #tpu.memory_space<vmem>>) attributes {dimension_semantics = [#tpu.dimension_semantics<parallel>, #tpu.dimension_semantics<arbitrary>], iteration_bounds = array<i64: 1, 2>, scalar_prefetch = 0 : i64, scratch_operands = 2 : i64, tpu.core_type = #tpu.core_type<tc>, window_params = [{transform_indices = @transform_0, window_bounds = array<i64: 16, 32>}, {transform_indices = @transform_1, window_bounds = array<i64: 32, 64>}, {transform_indices = @transform_2, window_bounds = array<i64: 64, 32>}, {transform_indices = @transform_3, window_bounds = array<i64: 32, 128>}, {pipeline_mode = #tpu.pipeline_mode<synchronous>, transform_indices = @transform_4, window_bounds = array<i64: 1, 32>}, {transform_indices = @transform_5, window_bounds = array<i64: 16, 32>}, {transform_indices = @transform_6, window_bounds = array<i64: 16, 128>}, {transform_indices = @transform_7, window_bounds = array<i64: 16, 128>}]} {
    %c1_i32 = arith.constant 1 : i32
    %0 = arith.cmpi slt, %arg1, %c1_i32 : i32
    %1 = arith.extui %0 : i1 to i32
    %c0_i32 = arith.constant 0 : i32
    %2 = arith.cmpi ne, %1, %c0_i32 : i32
    scf.if %2 {
      %c0_i32_2 = arith.constant 0 : i32
      %6 = arith.cmpi eq, %arg1, %c0_i32_2 : i32
      %7 = arith.extui %6 : i1 to i32
      %c0_i32_3 = arith.constant 0 : i32
      %8 = arith.cmpi ne, %7, %c0_i32_3 : i32
      scf.if %8 {
        %cst_20 = arith.constant 0.000000e+00 : f32
        %34 = vector.broadcast %cst_20 : f32 to vector<16x32xf32>
        %c0_21 = arith.constant 0 : index
        %c0_22 = arith.constant 0 : index
        %35 = vector.load %arg10[%c0_21, %c0_22] : memref<16x32xf32, #tpu.memory_space<vmem>>, vector<16x32xf32>
        tpu.vector_store %arg10[%c0_21, %c0_22], %34 {strides = array<i32>} : memref<16x32xf32, #tpu.memory_space<vmem>>, vector<16x32xf32>,
      } else {
      }
      %c0 = arith.constant 0 : index
      %c0_4 = arith.constant 0 : index
      %9 = vector.load %arg2[%c0, %c0_4] : memref<16x32xbf16, #tpu.memory_space<vmem>>, vector<16x32xbf16>
      %c0_5 = arith.constant 0 : index
      %c0_6 = arith.constant 0 : index
      %10 = vector.load %arg3[%c0_5, %c0_6] : memref<32x64xbf16, #tpu.memory_space<vmem>>, vector<32x64xbf16>
      %cst = arith.constant dense<0.000000e+00> : vector<16x64xf32>
      %11 = tpu.matmul %9, %10, %cst {dimension_numbers = #tpu.dot_dimension_numbers<[1], [0], [0], [1], [0, 0, 1, 1], [], []>} : vector<16x32xbf16>, vector<32x64xbf16>, vector<16x64xf32> -> vector<16x64xf32>
      %12 = arith.mulf %11, %11 : vector<16x64xf32>
      %13 = arith.mulf %11, %12 : vector<16x64xf32>
      %cst_7 = arith.constant 4.471500e-02 : f32
      %14 = vector.broadcast %cst_7 : f32 to vector<16x64xf32>
      %15 = arith.mulf %14, %13 : vector<16x64xf32>
      %16 = arith.addf %11, %15 : vector<16x64xf32>
      %cst_8 = arith.constant 0.797884583 : f32
      %17 = vector.broadcast %cst_8 : f32 to vector<16x64xf32>
      %18 = arith.mulf %17, %16 : vector<16x64xf32>
      %19 = math.tanh %18 : vector<16x64xf32>
      %cst_9 = arith.constant 1.000000e+00 : f32
      %20 = vector.broadcast %cst_9 : f32 to vector<16x64xf32>
      %21 = arith.addf %20, %19 : vector<16x64xf32>
      %cst_10 = arith.constant 5.000000e-01 : f32
      %22 = vector.broadcast %cst_10 : f32 to vector<16x64xf32>
      %23 = arith.mulf %22, %21 : vector<16x64xf32>
      %24 = arith.mulf %11, %23 : vector<16x64xf32>
      %c0_11 = arith.constant 0 : index
      %c0_12 = arith.constant 0 : index
      %25 = vector.load %arg10[%c0_11, %c0_12] : memref<16x32xf32, #tpu.memory_space<vmem>>, vector<16x32xf32>
      %26 = arith.truncf %24 : vector<16x64xf32> to vector<16x64xbf16>
      %c0_13 = arith.constant 0 : index
      %c0_14 = arith.constant 0 : index
      %27 = vector.load %arg4[%c0_13, %c0_14] : memref<64x32xbf16, #tpu.memory_space<vmem>>, vector<64x32xbf16>
      %cst_15 = arith.constant dense<0.000000e+00> : vector<16x32xf32>
      %28 = tpu.matmul %26, %27, %cst_15 {dimension_numbers = #tpu.dot_dimension_numbers<[1], [0], [0], [1], [0, 0, 1, 1], [], []>} : vector<16x64xbf16>, vector<64x32xbf16>, vector<16x32xf32> -> vector<16x32xf32>
      %29 = arith.addf %25, %28 : vector<16x32xf32>
      %c0_16 = arith.constant 0 : index
      %c0_17 = arith.constant 0 : index
      %30 = vector.load %arg10[%c0_16, %c0_17] : memref<16x32xf32, #tpu.memory_space<vmem>>, vector<16x32xf32>
      tpu.vector_store %arg10[%c0_16, %c0_17], %29 {strides = array<i32>} : memref<16x32xf32, #tpu.memory_space<vmem>>, vector<16x32xf32>,
      %c0_i32_18 = arith.constant 0 : i32
      %31 = arith.cmpi eq, %arg1, %c0_i32_18 : i32
      %32 = arith.extui %31 : i1 to i32
      %c0_i32_19 = arith.constant 0 : i32
      %33 = arith.cmpi ne, %32, %c0_i32_19 : i32
      scf.if %33 {
        %c0_20 = arith.constant 0 : index
        %c0_21 = arith.constant 0 : index
        %34 = vector.load %arg10[%c0_20, %c0_21] : memref<16x32xf32, #tpu.memory_space<vmem>>, vector<16x32xf32>
        %35 = arith.truncf %34 : vector<16x32xf32> to vector<16x32xbf16>
        %c0_22 = arith.constant 0 : index
        %c0_23 = arith.constant 0 : index
        %36 = vector.load %arg11[%c0_22, %c0_23] : memref<16x32xbf16, #tpu.memory_space<vmem>>, vector<16x32xbf16>
        tpu.vector_store %arg11[%c0_22, %c0_23], %35 {strides = array<i32>} : memref<16x32xbf16, #tpu.memory_space<vmem>>, vector<16x32xbf16>,
        %c0_24 = arith.constant 0 : index
        %c0_25 = arith.constant 0 : index
        %37 = vector.load %arg7[%c0_24, %c0_25] : memref<16x32xbf16, #tpu.memory_space<vmem>>, vector<16x32xbf16>
        tpu.vector_store %arg7[%c0_24, %c0_25], %35 {strides = array<i32>} : memref<16x32xbf16, #tpu.memory_space<vmem>>, vector<16x32xbf16>,
        %c0_26 = arith.constant 0 : index
        %c0_27 = arith.constant 0 : index
        %38 = vector.load %arg6[%c0_26, %c0_27] : memref<1x32xbf16, #tpu.memory_space<vmem>>, vector<1x32xbf16>
        %39 = arith.extf %38 : vector<1x32xbf16> to vector<1x32xf32>
        %40 = vector.broadcast %39 : vector<1x32xf32> to vector<16x32xf32>
        %41 = arith.mulf %34, %40 : vector<16x32xf32>
        %cst_28 = arith.constant dense<0.000000e+00> : vector<16xf32>
        %42 = vector.multi_reduction <add>, %41, %cst_28 [1] : vector<16x32xf32> to vector<16xf32>
        %43 = vector.shape_cast %42 : vector<16xf32> to vector<16x1xf32>
        %44 = vector.shape_cast %43 : vector<16x1xf32> to vector<16x1xf32>
        %45 = vector.broadcast %44 : vector<16x1xf32> to vector<16x128xf32>
        %c0_29 = arith.constant 0 : index
        %c0_30 = arith.constant 0 : index
        %46 = vector.load %arg9[%c0_29, %c0_30] : memref<16x128xf32, #tpu.memory_space<vmem>>, vector<16x128xf32>
        tpu.vector_store %arg9[%c0_29, %c0_30], %45 {strides = array<i32>} : memref<16x128xf32, #tpu.memory_space<vmem>>, vector<16x128xf32>,
      } else {
      }
    } else {
    }
    %c1_i32_0 = arith.constant 1 : i32
    %3 = arith.cmpi sge, %arg1, %c1_i32_0 : i32
    %4 = arith.extui %3 : i1 to i32
    %c0_i32_1 = arith.constant 0 : i32
    %5 = arith.cmpi ne, %4, %c0_i32_1 : i32
    scf.if %5 {
      %c0 = arith.constant 0 : index
      %c0_2 = arith.constant 0 : index
      %6 = vector.load %arg11[%c0, %c0_2] : memref<16x32xbf16, #tpu.memory_space<vmem>>, vector<16x32xbf16>
      %c0_3 = arith.constant 0 : index
      %c0_4 = arith.constant 0 : index
      %7 = vector.load %arg5[%c0_3, %c0_4] : memref<32x128xbf16, #tpu.memory_space<vmem>>, vector<32x128xbf16>
      %cst = arith.constant dense<0.000000e+00> : vector<16x128xf32>
      %8 = tpu.matmul %6, %7, %cst {dimension_numbers = #tpu.dot_dimension_numbers<[1], [0], [0], [1], [0, 0, 1, 1], [], []>} : vector<16x32xbf16>, vector<32x128xbf16>, vector<16x128xf32> -> vector<16x128xf32>
      %9 = arith.truncf %8 : vector<16x128xf32> to vector<16x128xbf16>
      %c0_5 = arith.constant 0 : index
      %c0_6 = arith.constant 0 : index
      %10 = vector.load %arg8[%c0_5, %c0_6] : memref<16x128xbf16, #tpu.memory_space<vmem>>, vector<16x128xbf16>
      tpu.vector_store %arg8[%c0_5, %c0_6], %9 {strides = array<i32>} : memref<16x128xbf16, #tpu.memory_space<vmem>>, vector<16x128xbf16>,
    } else {
    }
    return
  }
  func.func @transform_0(%arg0: i32, %arg1: i32) -> (i32, i32) {
    %c0_i32 = arith.constant 0 : i32
    %c0_i32_0 = arith.constant 0 : i32
    return %arg0, %c0_i32 : i32, i32
  }
  func.func @transform_1(%arg0: i32, %arg1: i32) -> (i32, i32) {
    %c0_i32 = arith.constant 0 : i32
    %0 = arith.minsi %arg1, %c0_i32 : i32
    %c0_i32_0 = arith.constant 0 : i32
    %c0_i32_1 = arith.constant 0 : i32
    return %c0_i32_0, %0 : i32, i32
  }
  func.func @transform_2(%arg0: i32, %arg1: i32) -> (i32, i32) {
    %c0_i32 = arith.constant 0 : i32
    %0 = arith.minsi %arg1, %c0_i32 : i32
    %c0_i32_0 = arith.constant 0 : i32
    %c0_i32_1 = arith.constant 0 : i32
    return %0, %c0_i32_0 : i32, i32
  }
  func.func @transform_3(%arg0: i32, %arg1: i32) -> (i32, i32) {
    %c1_i32 = arith.constant 1 : i32
    %0 = arith.subi %arg1, %c1_i32 : i32
    %c0_i32 = arith.constant 0 : i32
    %1 = arith.maxsi %0, %c0_i32 : i32
    %c0_i32_0 = arith.constant 0 : i32
    %c0_i32_1 = arith.constant 0 : i32
    return %c0_i32_0, %1 : i32, i32
  }
  func.func @transform_4(%arg0: i32, %arg1: i32) -> (i32, i32) {
    %c0_i32 = arith.constant 0 : i32
    %c0_i32_0 = arith.constant 0 : i32
    %c0_i32_1 = arith.constant 0 : i32
    return %c0_i32, %c0_i32_0 : i32, i32
  }
  func.func @transform_5(%arg0: i32, %arg1: i32) -> (i32, i32) {
    %c0_i32 = arith.constant 0 : i32
    %c0_i32_0 = arith.constant 0 : i32
    return %arg0, %c0_i32 : i32, i32
  }
  func.func @transform_6(%arg0: i32, %arg1: i32) -> (i32, i32) {
    %c1_i32 = arith.constant 1 : i32
    %0 = arith.subi %arg1, %c1_i32 : i32
    %c0_i32 = arith.constant 0 : i32
    %1 = arith.maxsi %0, %c0_i32 : i32
    %c0_i32_0 = arith.constant 0 : i32
    return %arg0, %1 : i32, i32
  }
  func.func @transform_7(%arg0: i32, %arg1: i32) -> (i32, i32) {
    %c0_i32 = arith.constant 0 : i32
    %c0_i32_0 = arith.constant 0 : i32
    return %arg0, %c0_i32 : i32, i32
  }
}

</mosaic_0001>

<llo_original>
// kernel: policy_and_value_forward.1
$region0: #{policy_and_value_forward.1}
  #allocation0 [shape = 'u32[]', space=smem, size = 0x4, offset = 0x4, fixed_abs, tag = 'smem constant byte address 0x4 - core index']
  #allocation1 [shape = 'u32[72,128]{1,0:T(1,128)}', space=vmem, size = 0x9000, scoped, tag = 'internal scratch']
  #allocation2 [shape = 'f32[16,32]{1,0:T(8,128)}', space=vmem, size = 0x2000, scoped, tag = 'scratch operand']
  #allocation3 [shape = 'bf16[16,32]{1,0:T(8,128)(2,1)}', space=vmem, size = 0x1000, scoped, tag = 'scratch operand']
  %s0 = inlined_call_operand.vmem [shape: bf16[16,32], index: 0, kind: input, shape index: {}]
  %s1 = inlined_call_operand.vmem [shape: bf16[32,64], index: 1, kind: input, shape index: {}]
  %s2 = inlined_call_operand.vmem [shape: bf16[64,32], index: 2, kind: input, shape index: {}]
  %s3 = inlined_call_operand.vmem [shape: bf16[32,128], index: 3, kind: input, shape index: {}]
  %s4 = inlined_call_operand.vmem [shape: bf16[1,32], index: 4, kind: input, shape index: {}]
  %s5 = inlined_call_operand.hbm [shape: bf16[16,32], index: 5, kind: output, shape index: {0}]
  %s6 = inlined_call_operand.hbm [shape: bf16[16,128], index: 6, kind: output, shape index: {1}]
  %s7 = inlined_call_operand.vmem [shape: f32[16,128], index: 7, kind: output, shape index: {2}]
  %8 = xla_tuple %s5, %s6, %s7
  %s9 = sld [smem:[#allocation0]]
  $region85: #{policy_and_value_forward.1} parent=0
    _
  %s11 = ssub.s32 1, %s9
  %s12 = scalar_select 0, %s11, %s9
  $region1: #{policy_and_value_forward.1} parent=0
    #allocation4 [shape = 'u8[4096]{0}', space=vmem, size = 0x1000, scoped, tag = 'output window, operand 0, single buffered']
    #allocation5 [shape = 's32[2]{0}', space=sflag, size = 0x8, scoped, tag = 'scoped memory for policy_and_value_forward.1']
    #allocation6 [shape = 'u8[8192]{0}', space=vmem, size = 0x2000, scoped, tag = 'output window, operand 1']
    #allocation7 [shape = 's32[2]{0}', space=sflag, size = 0x8, scoped, tag = 'scoped memory for policy_and_value_forward.1']
    %13 = vsyncpa [#allocation5], 0
    %14 = vsyncpa [#allocation7], 0
    %s15 = scalar_lea.sflag [#allocation7], 1
    %16 = vsyncpa %s15, 0
    loop: start=0, step=1, limit=4
    $region2: #{policy_and_value_forward.1} parent=1 // loop_pre_header
      _
    $region3: #{policy_and_value_forward.1} parent=1 // loop_header
      %s18 = sphi 0, %s22
      %p19 = scmp.ge.s32.totalorder %s18, 4
      %s25 = sphi 0, %s37
      %s26 = sphi 0, %s33
      %s27 = sphi 0, %s25
      %s28 = sphi 0, %s26
      %s29 = sphi 0, %s27
      %s30 = sphi 0, %s28
      %s40 = sphi 0, %s42
      %s43 = sphi 0, %s40
      %s44 = sphi 0, %s43
      %s60 = sphi 0, %s44
      %s70 = sphi 0, %s72
      %s73 = sphi 0, %s70
      %s74 = sphi 0, %s73
      %s90 = sphi 0, %s74
      %s100 = sphi 0, %s102
      %s103 = sphi 0, %s100
      %s104 = sphi 0, %s103
      %s120 = sphi 0, %s104
      %s132 = sphi 0, %s134
      %s135 = sphi 0, %s132
      %s136 = sphi 0, %s135
      %s152 = sphi 0, %s136
      %s156 = sphi 0, %s156
      %s158 = sphi 0, %s156
      %s159 = sphi 0, %s158
      %s173 = sphi 0, %s159
      %s179 = sphi 0, %s181
      %s182 = sphi 0, %s179
      %s183 = sphi 0, %s182
      %s199 = sphi 0, %s183
      %s213 = sphi 0, %s215
      %s216 = sphi 0, %s213
      %s217 = sphi 0, %s216
      %s233 = sphi 0, %s217
      %s239 = sphi 0, %s241
      %s242 = sphi 0, %s239
      %s243 = sphi 0, %s242
      %s259 = sphi 0, %s243
    $region4: #{policy_and_value_forward.1} parent=1 // loop_header_branch
      %21 = sbr.rel (%p19) target = $region8
    $region5: #{policy_and_value_forward.1} parent=1 // loop_body
      %s23 = ssub.s32 %s18, 1
      %s24 = ssub.s32 %s18, 2
      %s31 = sadd.s32 1, %s26
      %p32 = scmp.ge.s32.totalorder %s31, 2
      %s33 = scalar_select %p32, 0, %s31
      %s34 = sadd.s32 1, %s25
      %s35 = scalar_select %p32, %s34, %s25
      %p36 = scmp.ge.s32.totalorder %s35, 1
      %s37 = scalar_select %p36, 0, %s35
      %s38 = ssub.s32 %s25, %s37
      %p39 = scmp.eq.s32.totalorder %s38, 0
      %s41 = sadd.s32 %s40, 1
      %s42 = scalar_select %p39, %s40, %s41
      %p45 = pneg %p39
      %p46 = scmp.eq.s32.totalorder %s18, 1
      %p47 = por %p45, %p46
      %p48 = scmp.ne.s32.totalorder %s40, %s43
      %p49 = scmp.eq.s32.totalorder %s18, 0
      %p50 = por %p48, %p49
      %p51 = scmp.ne.s32.totalorder %s40, %s43
      %p52 = scmp.eq.s32.totalorder %s23, 1
      %p53 = por %p51, %p52
      %p54 = scmp.ne.s32.totalorder %s43, %s44
      %p55 = scmp.eq.s32.totalorder %s23, 0
      %p56 = por %p54, %p55
      %p57 = scmp.ne.s32.totalorder %s43, %s44
      %p58 = scmp.eq.s32.totalorder %s24, 1
      %p59 = por %p57, %p58
      %p61 = scmp.ne.s32.totalorder %s44, %s60
      %p62 = scmp.eq.s32.totalorder %s24, 0
      %p63 = por %p61, %p62
      %p64 = scmp.lt.s32.totalorder %s26, 0
      %s65 = scalar_select %p64, %s26, 0
      %p66 = scmp.lt.s32.totalorder %s33, 0
      %s67 = scalar_select %p66, %s33, 0
      %s68 = ssub.s32 %s65, %s67
      %p69 = scmp.eq.s32.totalorder %s68, 0
      %s71 = sadd.s32 %s70, 1
      %s72 = scalar_select %p69, %s70, %s71
      %p75 = pneg %p69
      %p76 = scmp.eq.s32.totalorder %s18, 1
      %p77 = por %p75, %p76
      %p78 = scmp.ne.s32.totalorder %s70, %s73
      %p79 = scmp.eq.s32.totalorder %s18, 0
      %p80 = por %p78, %p79
      %p81 = scmp.ne.s32.totalorder %s70, %s73
      %p82 = scmp.eq.s32.totalorder %s23, 1
      %p83 = por %p81, %p82
      %p84 = scmp.ne.s32.totalorder %s73, %s74
      %p85 = scmp.eq.s32.totalorder %s23, 0
      %p86 = por %p84, %p85
      %p87 = scmp.ne.s32.totalorder %s73, %s74
      %p88 = scmp.eq.s32.totalorder %s24, 1
      %p89 = por %p87, %p88
      %p91 = scmp.ne.s32.totalorder %s74, %s90
      %p92 = scmp.eq.s32.totalorder %s24, 0
      %p93 = por %p91, %p92
      %p94 = scmp.lt.s32.totalorder %s26, 0
      %s95 = scalar_select %p94, %s26, 0
      %p96 = scmp.lt.s32.totalorder %s33, 0
      %s97 = scalar_select %p96, %s33, 0
      %s98 = ssub.s32 %s95, %s97
      %p99 = scmp.eq.s32.totalorder %s98, 0
      %s101 = sadd.s32 %s100, 1
      %s102 = scalar_select %p99, %s100, %s101
      %p105 = pneg %p99
      %p106 = scmp.eq.s32.totalorder %s18, 1
      %p107 = por %p105, %p106
      %p108 = scmp.ne.s32.totalorder %s100, %s103
      %p109 = scmp.eq.s32.totalorder %s18, 0
      %p110 = por %p108, %p109
      %p111 = scmp.ne.s32.totalorder %s100, %s103
      %p112 = scmp.eq.s32.totalorder %s23, 1
      %p113 = por %p111, %p112
      %p114 = scmp.ne.s32.totalorder %s103, %s104
      %p115 = scmp.eq.s32.totalorder %s23, 0
      %p116 = por %p114, %p115
      %p117 = scmp.ne.s32.totalorder %s103, %s104
      %p118 = scmp.eq.s32.totalorder %s24, 1
      %p119 = por %p117, %p118
      %p121 = scmp.ne.s32.totalorder %s104, %s120
      %p122 = scmp.eq.s32.totalorder %s24, 0
      %p123 = por %p121, %p122
      %s124 = ssub.s32 %s26, 1
      %p125 = scmp.gt.s32.totalorder %s124, 0
      %s126 = scalar_select %p125, %s124, 0
      %s127 = ssub.s32 %s33, 1
      %p128 = scmp.gt.s32.totalorder %s127, 0
      %s129 = scalar_select %p128, %s127, 0
      %s130 = ssub.s32 %s126, %s129
      %p131 = scmp.eq.s32.totalorder %s130, 0
      %s133 = sadd.s32 %s132, 1
      %s134 = scalar_select %p131, %s132, %s133
      %p137 = pneg %p131
      %p138 = scmp.eq.s32.totalorder %s18, 1
      %p139 = por %p137, %p138
      %p140 = scmp.ne.s32.totalorder %s132, %s135
      %p141 = scmp.eq.s32.totalorder %s18, 0
      %p142 = por %p140, %p141
      %p143 = scmp.ne.s32.totalorder %s132, %s135
      %p144 = scmp.eq.s32.totalorder %s23, 1
      %p145 = por %p143, %p144
      %p146 = scmp.ne.s32.totalorder %s135, %s136
      %p147 = scmp.eq.s32.totalorder %s23, 0
      %p148 = por %p146, %p147
      %p149 = scmp.ne.s32.totalorder %s135, %s136
      %p150 = scmp.eq.s32.totalorder %s24, 1
      %p151 = por %p149, %p150
      %p153 = scmp.ne.s32.totalorder %s136, %s152
      %p154 = scmp.eq.s32.totalorder %s24, 0
      %p155 = por %p153, %p154
      %s157 = sadd.s32 %s156, 1
      %p160 = scmp.eq.s32.totalorder %s18, 1
      %p161 = scmp.ne.s32.totalorder %s156, %s158
      %p162 = scmp.eq.s32.totalorder %s18, 0
      %p163 = por %p161, %p162
      %p164 = scmp.ne.s32.totalorder %s156, %s158
      %p165 = scmp.eq.s32.totalorder %s23, 1
      %p166 = por %p164, %p165
      %p167 = scmp.ne.s32.totalorder %s158, %s159
      %p168 = scmp.eq.s32.totalorder %s23, 0
      %p169 = por %p167, %p168
      %p170 = scmp.ne.s32.totalorder %s158, %s159
      %p171 = scmp.eq.s32.totalorder %s24, 1
      %p172 = por %p170, %p171
      %p174 = scmp.ne.s32.totalorder %s159, %s173
      %p175 = scmp.eq.s32.totalorder %s24, 0
      %p176 = por %p174, %p175
      %s177 = ssub.s32 %s25, %s37
      %p178 = scmp.eq.s32.totalorder %s177, 0
      %s180 = sadd.s32 %s179, 1
      %s181 = scalar_select %p178, %s179, %s180
      %p184 = pneg %p178
      %p185 = scmp.eq.s32.totalorder %s18, 1
      %p186 = por %p184, %p185
      %p187 = scmp.ne.s32.totalorder %s179, %s182
      %p188 = scmp.eq.s32.totalorder %s18, 0
      %p189 = por %p187, %p188
      %p190 = scmp.ne.s32.totalorder %s179, %s182
      %p191 = scmp.eq.s32.totalorder %s23, 1
      %p192 = por %p190, %p191
      %p193 = scmp.ne.s32.totalorder %s182, %s183
      %p194 = scmp.eq.s32.totalorder %s23, 0
      %p195 = por %p193, %p194
      %p196 = scmp.ne.s32.totalorder %s182, %s183
      %p197 = scmp.eq.s32.totalorder %s24, 1
      %p198 = por %p196, %p197
      %p200 = scmp.ne.s32.totalorder %s183, %s199
      %p201 = scmp.eq.s32.totalorder %s24, 0
      %p202 = por %p200, %p201
      %s203 = ssub.s32 %s26, 1
      %p204 = scmp.gt.s32.totalorder %s203, 0
      %s205 = scalar_select %p204, %s203, 0
      %s206 = ssub.s32 %s33, 1
      %p207 = scmp.gt.s32.totalorder %s206, 0
      %s208 = scalar_select %p207, %s206, 0
      %s209 = ssub.s32 %s25, %s37
      %s210 = ssub.s32 %s205, %s208
      %s211 = sor.u32 %s209, %s210
      %p212 = scmp.eq.s32.totalorder %s211, 0
      %s214 = sadd.s32 %s213, 1
      %s215 = scalar_select %p212, %s213, %s214
      %p218 = pneg %p212
      %p219 = scmp.eq.s32.totalorder %s18, 1
      %p220 = por %p218, %p219
      %p221 = scmp.ne.s32.totalorder %s213, %s216
      %p222 = scmp.eq.s32.totalorder %s18, 0
      %p223 = por %p221, %p222
      %p224 = scmp.ne.s32.totalorder %s213, %s216
      %p225 = scmp.eq.s32.totalorder %s23, 1
      %p226 = por %p224, %p225
      %p227 = scmp.ne.s32.totalorder %s216, %s217
      %p228 = scmp.eq.s32.totalorder %s23, 0
      %p229 = por %p227, %p228
      %p230 = scmp.ne.s32.totalorder %s216, %s217
      %p231 = scmp.eq.s32.totalorder %s24, 1
      %p232 = por %p230, %p231
      %p234 = scmp.ne.s32.totalorder %s217, %s233
      %p235 = scmp.eq.s32.totalorder %s24, 0
      %p236 = por %p234, %p235
      %s237 = ssub.s32 %s25, %s37
      %p238 = scmp.eq.s32.totalorder %s237, 0
      %s240 = sadd.s32 %s239, 1
      %s241 = scalar_select %p238, %s239, %s240
      %p244 = pneg %p238
      %p245 = scmp.eq.s32.totalorder %s18, 1
      %p246 = por %p244, %p245
      %p247 = scmp.ne.s32.totalorder %s239, %s242
      %p248 = scmp.eq.s32.totalorder %s18, 0
      %p249 = por %p247, %p248
      %p250 = scmp.ne.s32.totalorder %s239, %s242
      %p251 = scmp.eq.s32.totalorder %s23, 1
      %p252 = por %p250, %p251
      %p253 = scmp.ne.s32.totalorder %s242, %s243
      %p254 = scmp.eq.s32.totalorder %s23, 0
      %p255 = por %p253, %p254
      %p256 = scmp.ne.s32.totalorder %s242, %s243
      %p257 = scmp.eq.s32.totalorder %s24, 1
      %p258 = por %p256, %p257
      %p260 = scmp.ne.s32.totalorder %s243, %s259
      %p261 = scmp.eq.s32.totalorder %s24, 0
      %p262 = por %p260, %p261
      %p263 = scmp.le.s32.totalorder 1, %s18
      %p264 = scmp.lt.s32.totalorder %s18, 3
      %p265 = pnand %p263, %p264
      %p266 = pneg %p265
      // Predicated region
      $region9: #{policy_and_value_forward.1} parent=5 // pred_check
        _
      $region10: #{policy_and_value_forward.1} parent=5 // pred_check_branch
        %268 = sbr.rel (%p265) target = $region12
      $region11: #{policy_and_value_forward.1} parent=5 // pred_region
        %s269 = ssub.s32 %s18, 1
        // Predicated region
        $region13: #{policy_and_value_forward.1} parent=11 // pred_check
          %p270 = pneg %p56
        $region14: #{policy_and_value_forward.1} parent=11 // pred_check_branch
          %272 = sbr.rel (%p270) target = $region16
        $region15: #{policy_and_value_forward.1} parent=11 // pred_region
          %s273 = smul.u32 2, %s27
          %p274 = scmp.lt.s32.totalorder %s273, 1
          %s275 = scalar_select %p274, %s273, 1
          %s276 = smul.addr %s275, 4
          %s277 = scalar_lea.vmem %s0, %s276
          %s278 = smul.u32 2, %s27
        $region16: #{policy_and_value_forward.1} parent=11 // pred_fallthru
          _
        // Predicated region
        $region17: #{policy_and_value_forward.1} parent=11 // pred_check
          %p279 = pneg %p169
        $region18: #{policy_and_value_forward.1} parent=11 // pred_check_branch
          %281 = sbr.rel (%p279) target = $region20
        $region19: #{policy_and_value_forward.1} parent=11 // pred_region
          _
        $region20: #{policy_and_value_forward.1} parent=11 // pred_fallthru
          _
      $region12: #{policy_and_value_forward.1} parent=5 // pred_fallthru
        _
      %p282 = scmp.lt.s32.totalorder %s18, 2
      // Predicated region
      $region21: #{policy_and_value_forward.1} parent=5 // pred_check
        %p283 = pneg %p282
      $region22: #{policy_and_value_forward.1} parent=5 // pred_check_branch
        %285 = sbr.rel (%p283) target = $region24
      $region23: #{policy_and_value_forward.1} parent=5 // pred_region
        // Predicated region
        $region25: #{policy_and_value_forward.1} parent=23 // pred_check
          %p286 = pneg %p80
        $region26: #{policy_and_value_forward.1} parent=23 // pred_check_branch
          %288 = sbr.rel (%p286) target = $region28
        $region27: #{policy_and_value_forward.1} parent=23 // pred_region
          %p289 = scmp.lt.s32.totalorder %s26, 0
          %s290 = scalar_select %p289, %s26, 0
          %p291 = scmp.lt.s32.totalorder %s290, 0
          %s292 = scalar_select %p291, %s290, 0
          %s293 = smul.addr %s292, 4
          %s294 = scalar_lea.vmem %s1, %s293
          %p295 = scmp.lt.s32.totalorder %s26, 0
          %s296 = scalar_select %p295, %s26, 0
        $region28: #{policy_and_value_forward.1} parent=23 // pred_fallthru
          _
        // Predicated region
        $region29: #{policy_and_value_forward.1} parent=23 // pred_check
          %p297 = pneg %p110
        $region30: #{policy_and_value_forward.1} parent=23 // pred_check_branch
          %299 = sbr.rel (%p297) target = $region32
        $region31: #{policy_and_value_forward.1} parent=23 // pred_region
          %p300 = scmp.lt.s32.totalorder %s26, 0
          %s301 = scalar_select %p300, %s26, 0
          %s302 = smul.u32 8, %s301
          %p303 = scmp.lt.s32.totalorder %s302, 7
          %s304 = scalar_select %p303, %s302, 7
          %s305 = smul.addr %s304, 4
          %s306 = scalar_lea.vmem %s2, %s305
          %p307 = scmp.lt.s32.totalorder %s26, 0
          %s308 = scalar_select %p307, %s26, 0
          %s309 = smul.u32 8, %s308
        $region32: #{policy_and_value_forward.1} parent=23 // pred_fallthru
          _
        // Predicated region
        $region33: #{policy_and_value_forward.1} parent=23 // pred_check
          %p310 = pneg %p142
        $region34: #{policy_and_value_forward.1} parent=23 // pred_check_branch
          %312 = sbr.rel (%p310) target = $region36
        $region35: #{policy_and_value_forward.1} parent=23 // pred_region
          %s313 = ssub.s32 %s26, 1
          %p314 = scmp.gt.s32.totalorder %s313, 0
          %s315 = scalar_select %p314, %s313, 0
          %p316 = scmp.lt.s32.totalorder %s315, 0
          %s317 = scalar_select %p316, %s315, 0
          %s318 = smul.addr %s317, 4
          %s319 = scalar_lea.vmem %s3, %s318
          %s320 = ssub.s32 %s26, 1
          %p321 = scmp.gt.s32.totalorder %s320, 0
          %s322 = scalar_select %p321, %s320, 0
        $region36: #{policy_and_value_forward.1} parent=23 // pred_fallthru
          _
      $region24: #{policy_and_value_forward.1} parent=5 // pred_fallthru
        _
      %p323 = scmp.le.s32.totalorder 1, %s18
      %p324 = scmp.lt.s32.totalorder %s18, 3
      %p325 = pnand %p323, %p324
      %p326 = pneg %p325
      // Predicated region
      $region37: #{policy_and_value_forward.1} parent=5 // pred_check
        _
      $region38: #{policy_and_value_forward.1} parent=5 // pred_check_branch
        %328 = sbr.rel (%p325) target = $region40
      $region39: #{policy_and_value_forward.1} parent=5 // pred_region
        %s329 = ssub.s32 %s18, 1
        %s330 = smul.u32 2, %s27
        %p331 = scmp.lt.s32.totalorder %s330, 1
        %s332 = scalar_select %p331, %s330, 1
        %s333 = smul.addr %s332, 4
        %s334 = scalar_lea.vmem %s0, %s333
        %p335 = pneg %p56
        %p336 = pneg %p53
        %p337 = scmp.lt.s32.totalorder %s28, 0
        %s338 = scalar_select %p337, %s28, 0
        %p339 = scmp.lt.s32.totalorder %s338, 0
        %s340 = scalar_select %p339, %s338, 0
        %s341 = smul.addr %s340, 4
        %s342 = scalar_lea.vmem %s1, %s341
        %p343 = pneg %p86
        %p344 = pneg %p83
        %p345 = scmp.lt.s32.totalorder %s28, 0
        %s346 = scalar_select %p345, %s28, 0
        %s347 = smul.u32 8, %s346
        %p348 = scmp.lt.s32.totalorder %s347, 7
        %s349 = scalar_select %p348, %s347, 7
        %s350 = smul.addr %s349, 4
        %s351 = scalar_lea.vmem %s2, %s350
        %p352 = pneg %p116
        %p353 = pneg %p113
        %s354 = ssub.s32 %s28, 1
        %p355 = scmp.gt.s32.totalorder %s354, 0
        %s356 = scalar_select %p355, %s354, 0
        %p357 = scmp.lt.s32.totalorder %s356, 0
        %s358 = scalar_select %p357, %s356, 0
        %s359 = smul.addr %s358, 4
        %s360 = scalar_lea.vmem %s3, %s359
        %p361 = pneg %p148
        %p362 = pneg %p145
        %p363 = pneg %p169
        %p364 = pneg %p166
        %p365 = pneg %p195
        %p366 = pneg %p192
        %p367 = pneg %p229
        %p368 = pneg %p226
        %s369 = sand.u32 %s216, 1
        %s370 = scalar_lea.sflag [#allocation7], %s369
        %s371 = sand.u32 %s216, 1
        %s372 = smul.addr %s371, 8
        %s373 = scalar_lea.vmem [#allocation6], %s372
        %p374 = pneg %p255
        %p375 = pneg %p252
        %s376 = smul.u32 2, %s27
        %p377 = scmp.lt.s32.totalorder %s376, 1
        %s378 = scalar_select %p377, %s376, 1
        %s379 = smul.addr %s378, 8
        %s380 = scalar_lea.vmem %s7, %s379
        %s381 = smul.u32 2, %s27
        %p382 = scmp.lt.s32.totalorder %s381, 1
        %s383 = scalar_select %p382, %s381, 1
        %s384 = smul.addr %s383, 4
        %s385 = scalar_lea.vmem %s0, %s384
        %s386 = smul.u32 2, %s27
        %p387 = scmp.lt.s32.totalorder %s28, 0
        %s388 = scalar_select %p387, %s28, 0
        %p389 = scmp.lt.s32.totalorder %s388, 0
        %s390 = scalar_select %p389, %s388, 0
        %s391 = smul.addr %s390, 4
        %s392 = scalar_lea.vmem %s1, %s391
        %p393 = scmp.lt.s32.totalorder %s28, 0
        %s394 = scalar_select %p393, %s28, 0
        %p395 = scmp.lt.s32.totalorder %s28, 0
        %s396 = scalar_select %p395, %s28, 0
        %s397 = smul.u32 8, %s396
        %p398 = scmp.lt.s32.totalorder %s397, 7
        %s399 = scalar_select %p398, %s397, 7
        %s400 = smul.addr %s399, 4
        %s401 = scalar_lea.vmem %s2, %s400
        %p402 = scmp.lt.s32.totalorder %s28, 0
        %s403 = scalar_select %p402, %s28, 0
        %s404 = smul.u32 8, %s403
        %s405 = ssub.s32 %s28, 1
        %p406 = scmp.gt.s32.totalorder %s405, 0
        %s407 = scalar_select %p406, %s405, 0
        %p408 = scmp.lt.s32.totalorder %s407, 0
        %s409 = scalar_select %p408, %s407, 0
        %s410 = smul.addr %s409, 4
        %s411 = scalar_lea.vmem %s3, %s410
        %s412 = ssub.s32 %s28, 1
        %p413 = scmp.gt.s32.totalorder %s412, 0
        %s414 = scalar_select %p413, %s412, 0
        %s415 = smul.u32 2, %s27
        %s416 = ssub.s32 %s28, 1
        %p417 = scmp.gt.s32.totalorder %s416, 0
        %s418 = scalar_select %p417, %s416, 0
        %s419 = smul.u32 2, %s27
        %s420 = smul.u32 2, %s27
        %p421 = scmp.lt.s32.totalorder %s420, 1
        %s422 = scalar_select %p421, %s420, 1
        %s423 = smul.addr %s422, 8
        %s424 = scalar_lea.vmem %s7, %s423
        %s425 = smul.u32 2, %s27
        %p427 = scmp.lt.s32.totalorder %s28, 1
        // Predicated region
        $region41: #{policy_and_value_forward.1} parent=39 // pred_check
          %p428 = pneg %p427
        $region42: #{policy_and_value_forward.1} parent=39 // pred_check_branch
          %430 = sbr.rel (%p428) target = $region44
        $region43: #{policy_and_value_forward.1} parent=39 // pred_region
          %p431 = scmp.eq.s32.totalorder %s28, 0
          // Predicated region
          $region45: #{policy_and_value_forward.1} parent=43 // pred_check
            %p432 = pneg %p431
          $region46: #{policy_and_value_forward.1} parent=43 // pred_check_branch
            %434 = sbr.rel (%p432) target = $region48
          $region47: #{policy_and_value_forward.1} parent=43 // pred_region
            %vm435 = vcmask 261120
            %436 = vst.msk [vmem:[#allocation2] sm:$0xff] %vm435, 0.0
            %437 = vst.msk [vmem:[#allocation2 + $0x8] sm:$0xff] %vm435, 0.0
          $region48: #{policy_and_value_forward.1} parent=43 // pred_fallthru
            _
          %v438 = vld [vmem:[%s385] sm:$0xf]
          %v439 = vld [vmem:[%s385 + $0x4] sm:$0xf]
          %v440 = vld [vmem:[%s392] sm:$0xf]
          %v441 = vld [vmem:[%s392 + $0x4] sm:$0xf]
          %v442 = vld [vmem:[%s392 + $0x8] sm:$0xf]
          %v443 = vld [vmem:[%s392 + $0xc] sm:$0xf]
          %v446 = vunpack.c.l.b16 %v438
          %v447 = vunpack.c.l.b16 %v439
          %v448 = vpack.c.b16 %v447, %v446
          %v453 = vunpack.c.l.b16 %v440
          %v454 = vunpack.c.l.b16 %v441
          %v455 = vunpack.c.l.b16 %v442
          %v456 = vunpack.c.l.b16 %v443
          %v457 = vpack.c.b16 %v454, %v453
          %v458 = vpack.c.b16 %v456, %v455
          %vm461 = vcmask 261120
          %v463 = vsel %vm461, %v448, 0
          %465 = vmatpush.bf16.msra.mxu0 0
          %466 = vmatpush.bf16.msra.mxu0 0
          %467 = vmatpush.bf16.msra.mxu0 0
          %468 = vmatpush.bf16.msra.mxu0 0
          %469 = vmatpush.bf16.msra.mxu0 0
          %470 = vmatpush.bf16.msra.mxu0 0
          %471 = vmatpush.bf16.msra.mxu0 %v458
          %472 = vmatpush.bf16.msra.mxu0 %v457
          %473 = vmatmul.bf16.gmra.mxu0 %v463
          %v474 = vpop.f32.mrf.mxu0
          %v475 = vadd.f32 0.0, %v474
          %v476 = vpop.f32.mrf.mxu0
          %v477 = vadd.f32 0.0, %v476
          %478 = vdwg.mxu0
          %v479 = vmul.f32 %v475, %v475
          %v480 = vmul.f32 %v477, %v477
          %v481 = vmul.f32 %v475, %v479
          %v482 = vmul.f32 %v477, %v480
          %v483 = vmul.f32 %v481, 0.044715
          %v484 = vmul.f32 %v482, 0.044715
          %v485 = vadd.f32 %v475, %v483
          %v486 = vadd.f32 %v477, %v484
          %v487 = vmul.f32 %v485, 0.7978846
          %v488 = vmul.f32 %v486, 0.7978846
          %v489 = vtanh.pop %v487
          %v490 = vtanh.pop %v488
          %v491 = vadd.f32 %v489, 1.0
          %v492 = vadd.f32 %v490, 1.0
          %v493 = vmul.f32 %v491, 0.5
          %v494 = vmul.f32 %v492, 0.5
          %v495 = vmul.f32 %v475, %v493
          %v496 = vmul.f32 %v477, %v494
          %v497 = vld [vmem:[#allocation2] sm:$0xff]
          %v498 = vld [vmem:[#allocation2 + $0x8] sm:$0xff]
          %v499 = vpack.c.bf16 %v496, %v495
          %v500 = vld [vmem:[%s401] sm:$0xf]
          %v501 = vld [vmem:[%s401 + $0x4] sm:$0xf]
          %v502 = vld [vmem:[%s401 + $0x8] sm:$0xf]
          %v503 = vld [vmem:[%s401 + $0xc] sm:$0xf]
          %v504 = vld [vmem:[%s401 + $0x10] sm:$0xf]
          %v505 = vld [vmem:[%s401 + $0x14] sm:$0xf]
          %v506 = vld [vmem:[%s401 + $0x18] sm:$0xf]
          %v507 = vld [vmem:[%s401 + $0x1c] sm:$0xf]
          %v516 = vunpack.c.l.b16 %v500
          %v517 = vunpack.c.l.b16 %v501
          %v518 = vunpack.c.l.b16 %v502
          %v519 = vunpack.c.l.b16 %v503
          %v520 = vunpack.c.l.b16 %v504
          %v521 = vunpack.c.l.b16 %v505
          %v522 = vunpack.c.l.b16 %v506
          %v523 = vunpack.c.l.b16 %v507
          %v524 = vpack.c.b16 %v517, %v516
          %v525 = vpack.c.b16 %v519, %v518
          %v526 = vpack.c.b16 %v521, %v520
          %v527 = vpack.c.b16 %v523, %v522
          %vm532 = vcmask 523264
          %v534 = vsel %vm532, %v499, 0
          %536 = vmatpush.bf16.msra.mxu0 0
          %537 = vmatpush.bf16.msra.mxu0 0
          %538 = vmatpush.bf16.msra.mxu0 0
          %539 = vmatpush.bf16.msra.mxu0 0
          %540 = vmatpush.bf16.msra.mxu0 %v527
          %541 = vmatpush.bf16.msra.mxu0 %v526
          %542 = vmatpush.bf16.msra.mxu0 %v525
          %543 = vmatpush.bf16.msra.mxu0 %v524
          %544 = vmatmul.bf16.gmra.mxu0 %v534
          %v545 = vpop.f32.mrf.mxu0
          %v546 = vadd.f32 0.0, %v545
          %v547 = vpop.f32.mrf.mxu0
          %v548 = vadd.f32 0.0, %v547
          %549 = vdwg.mxu0
          %v550 = vadd.f32 %v497, %v546
          %v551 = vadd.f32 %v498, %v548
          %552 = vst.msk [vmem:[#allocation2] sm:$0xff] %vm461, %v550
          %553 = vst.msk [vmem:[#allocation2 + $0x8] sm:$0xff] %vm461, %v551
          // Predicated region
          $region49: #{policy_and_value_forward.1} parent=43 // pred_check
            %p554 = pneg %p431
          $region50: #{policy_and_value_forward.1} parent=43 // pred_check_branch
            %556 = sbr.rel (%p554) target = $region52
          $region51: #{policy_and_value_forward.1} parent=43 // pred_region
            %v557 = vld [vmem:[#allocation2] sm:$0xff]
            %v558 = vld [vmem:[#allocation2 + $0x8] sm:$0xff]
            %v559 = vpack.c.bf16 %v557, %v557
            %v560 = vpack.c.bf16 %v558, %v558
            %vm561 = vcmask 257024
            %562 = vst.msk [vmem:[#allocation3] sm:$0xf] %vm561, %v559
            %563 = vst.msk [vmem:[#allocation3 + $0x4] sm:$0xf] %vm561, %v560
            %564 = vst.msk [vmem:[#allocation4] sm:$0xf] %vm561, %v559
            %565 = vst.msk [vmem:[#allocation4 + $0x4] sm:$0xf] %vm561, %v560
            %v566 = vld [vmem:[%s4] sm:$0x1]
            %v567 = vunpack.c.l.bf16 %v566
            %v568 = vperm.slane %v567, 0
            %v569 = vmul.f32 %v557, %v568
            %v570 = vmul.f32 %v558, %v568
            %v571 = vsel %vm461, %v569, 0.0
            %572 = vadd.xlane.f32.xlu0 %v571
            %v573 = vpop.xlane.xlu0 %572
            %v574 = vsel %vm461, %v570, 0.0
            %575 = vadd.xlane.f32.xlu0 %v574
            %v576 = vpop.xlane.xlu0 %575
            %577 = vst [vmem:[%s424] sm:$0xff] %v573
            %578 = vst [vmem:[%s424 + $0x8] sm:$0xff] %v576
          $region52: #{policy_and_value_forward.1} parent=43 // pred_fallthru
            _
        $region44: #{policy_and_value_forward.1} parent=39 // pred_fallthru
          _
        %p579 = scmp.ge.s32.totalorder %s28, 1
        // Predicated region
        $region53: #{policy_and_value_forward.1} parent=39 // pred_check
          %p580 = pneg %p579
        $region54: #{policy_and_value_forward.1} parent=39 // pred_check_branch
          %582 = sbr.rel (%p580) target = $region56
        $region55: #{policy_and_value_forward.1} parent=39 // pred_region
          %v583 = vld [vmem:[#allocation3] sm:$0xf]
          %v584 = vld [vmem:[#allocation3 + $0x4] sm:$0xf]
          %v585 = vld [vmem:[%s411] sm:$0xf]
          %v586 = vld [vmem:[%s411 + $0x4] sm:$0xf]
          %v587 = vld [vmem:[%s411 + $0x8] sm:$0xf]
          %v588 = vld [vmem:[%s411 + $0xc] sm:$0xf]
          %v591 = vunpack.c.l.b16 %v583
          %v592 = vunpack.c.l.b16 %v584
          %v593 = vpack.c.b16 %v592, %v591
          %v598 = vunpack.c.l.b16 %v585
          %v599 = vunpack.c.l.b16 %v586
          %v600 = vunpack.c.l.b16 %v587
          %v601 = vunpack.c.l.b16 %v588
          %v602 = vpack.c.b16 %v599, %v598
          %v603 = vpack.c.b16 %v601, %v600
          %vm606 = vcmask 261120
          %v608 = vsel %vm606, %v593, 0
          %610 = vmatpush.bf16.msra.mxu0 0
          %611 = vmatpush.bf16.msra.mxu0 0
          %612 = vmatpush.bf16.msra.mxu0 0
          %613 = vmatpush.bf16.msra.mxu0 0
          %614 = vmatpush.bf16.msra.mxu0 0
          %615 = vmatpush.bf16.msra.mxu0 0
          %616 = vmatpush.bf16.msra.mxu0 %v603
          %617 = vmatpush.bf16.msra.mxu0 %v602
          %618 = vmatmul.bf16.gmra.mxu0 %v608
          %v619 = vpop.f32.mrf.mxu0
          %v620 = vadd.f32 0.0, %v619
          %v621 = vpop.f32.mrf.mxu0
          %v622 = vadd.f32 0.0, %v621
          %623 = vdwg.mxu0
          %v624 = vpack.c.bf16 %v620, %v620
          %v625 = vpack.c.bf16 %v622, %v622
          %626 = vst [vmem:[%s373] sm:$0xf] %v624
          %627 = vst [vmem:[%s373 + $0x4] sm:$0xf] %v625
        $region56: #{policy_and_value_forward.1} parent=39 // pred_fallthru
          _
        %s628 = sand.u32 %s216, 1
        %s629 = scalar_lea.sflag [#allocation7], %s628
        %s630 = sand.u32 %s216, 1
        %s631 = smul.addr %s630, 8
        %s632 = scalar_lea.vmem [#allocation6], %s631
        %s633 = smul.u32 2, %s27
        %p634 = scmp.lt.s32.totalorder %s633, 1
        %s635 = scalar_select %p634, %s633, 1
        %s636 = smul.addr %s635, 8
        %s637 = scalar_lea.vmem %s7, %s636
        // Predicated region
        $region57: #{policy_and_value_forward.1} parent=39 // pred_check
          %p638 = pneg %p192
        $region58: #{policy_and_value_forward.1} parent=39 // pred_check_branch
          %640 = sbr.rel (%p638) target = $region60
        $region59: #{policy_and_value_forward.1} parent=39 // pred_region
          %s641 = smul.u32 2, %s27
          %643 = vsyncadd [#allocation5], 0
          %s644 = smul.addr %s641, 4
          %s645 = scalar_lea.hbm %s5, %s644
          %s646 = sshll.u32 [#allocation4], 4
          %s647 = int_to_ptr.vmem [resolvable:$true] %s646
          %s648 = sshll.u32 %s645, 4
          %s649 = int_to_ptr.hbm [resolvable:$true] %s648
          %654 = dma.vmem_to_hbm [thread:$0]  %s647, 128, %s649, [#allocation5], 64, 64, 4
        $region60: #{policy_and_value_forward.1} parent=39 // pred_fallthru
          _
        // Predicated region
        $region61: #{policy_and_value_forward.1} parent=39 // pred_check
          %p655 = pneg %p226
        $region62: #{policy_and_value_forward.1} parent=39 // pred_check_branch
          %657 = sbr.rel (%p655) target = $region64
        $region63: #{policy_and_value_forward.1} parent=39 // pred_region
          %s658 = ssub.s32 %s28, 1
          %p659 = scmp.gt.s32.totalorder %s658, 0
          %s660 = scalar_select %p659, %s658, 0
          %s661 = smul.u32 2, %s27
          %663 = vsyncadd %s629, 0
          %s664 = sadd.s32 %s660, %s661
          %s665 = smul.addr %s664, 4
          %s666 = scalar_lea.hbm %s6, %s665
          %s667 = sshll.u32 %s632, 4
          %s668 = int_to_ptr.vmem [resolvable:$true] %s667
          %s669 = sshll.u32 %s666, 4
          %s670 = int_to_ptr.hbm [resolvable:$true] %s669
          %675 = dma.vmem_to_hbm [thread:$0]  %s668, 128, %s670, %s629, 64, 64, 4
        $region64: #{policy_and_value_forward.1} parent=39 // pred_fallthru
          _
        // Predicated region
        $region65: #{policy_and_value_forward.1} parent=39 // pred_check
          %p676 = pneg %p252
        $region66: #{policy_and_value_forward.1} parent=39 // pred_check_branch
          %678 = sbr.rel (%p676) target = $region68
        $region67: #{policy_and_value_forward.1} parent=39 // pred_region
          %s679 = smul.u32 2, %s27
        $region68: #{policy_and_value_forward.1} parent=39 // pred_fallthru
          _
        // Predicated region
        $region69: #{policy_and_value_forward.1} parent=39 // pred_check
          %p680 = pneg %p192
        $region70: #{policy_and_value_forward.1} parent=39 // pred_check_branch
          %682 = sbr.rel (%p680) target = $region72
        $region71: #{policy_and_value_forward.1} parent=39 // pred_region
          %684 = dma.done [#allocation5], 128
        $region72: #{policy_and_value_forward.1} parent=39 // pred_fallthru
          _
        // Predicated region
        $region73: #{policy_and_value_forward.1} parent=39 // pred_check
          %p685 = pneg %p252
        $region74: #{policy_and_value_forward.1} parent=39 // pred_check_branch
          %687 = sbr.rel (%p685) target = $region76
        $region75: #{policy_and_value_forward.1} parent=39 // pred_region
          %s688 = smul.u32 2, %s27
          %p689 = scmp.lt.s32.totalorder %s688, 1
          %s690 = scalar_select %p689, %s688, 1
          %s691 = smul.addr %s690, 8
          %s692 = scalar_lea.vmem %s7, %s691
        $region76: #{policy_and_value_forward.1} parent=39 // pred_fallthru
          _
      $region40: #{policy_and_value_forward.1} parent=5 // pred_fallthru
        _
      %p693 = scmp.le.s32.totalorder 2, %s18
      // Predicated region
      $region77: #{policy_and_value_forward.1} parent=5 // pred_check
        %p694 = pneg %p693
      $region78: #{policy_and_value_forward.1} parent=5 // pred_check_branch
        %696 = sbr.rel (%p694) target = $region80
      $region79: #{policy_and_value_forward.1} parent=5 // pred_region
        %s697 = ssub.s32 %s18, 2
        // Predicated region
        $region81: #{policy_and_value_forward.1} parent=79 // pred_check
          %p698 = pneg %p232
        $region82: #{policy_and_value_forward.1} parent=79 // pred_check_branch
          %700 = sbr.rel (%p698) target = $region84
        $region83: #{policy_and_value_forward.1} parent=79 // pred_region
          %s701 = sand.u32 %s217, 1
          %s702 = scalar_lea.sflag [#allocation7], %s701
          %s703 = sand.u32 %s217, 1
          %s704 = smul.addr %s703, 8
          %s705 = scalar_lea.vmem [#allocation6], %s704
          %707 = dma.done %s702, 128
        $region84: #{policy_and_value_forward.1} parent=79 // pred_fallthru
          _
      $region80: #{policy_and_value_forward.1} parent=5 // pred_fallthru
        _
    $region6: #{policy_and_value_forward.1} parent=1 // loop_footer
      %s22 = sadd.s32 1, %s18
    $region7: #{policy_and_value_forward.1} parent=1 // loop_footer_branch
      %17 = sbr.rel target = $region3
    $region8: #{policy_and_value_forward.1} parent=1 // loop_exit
      _
    %708 = vsyncpa [#allocation5], 1
    %s709 = scalar_lea.sflag [#allocation5], 1
    %710 = vsyncpa %s709, 1
    %711 = vsyncpa [#allocation7], 1
    %s712 = scalar_lea.sflag [#allocation7], 1
    %713 = vsyncpa %s712, 1

</llo_original>
